<compile_context>
chip_gen: v7x
topology: tpu7x:2x2x1
jax: 0.10.0
libtpu: 0.0.40
codegen_flags: <defaults>
</compile_context>

<pallas_src>
import functools

import jax
import jax.numpy as jnp
from jax.experimental import pallas as pl
from jax.experimental.pallas import tpu as pltpu


def _cdiv(a, b):
    return -(-a // b)


def _trilinear_kernel(x_ref, o_ref, *, num_channels):
    x = x_ref[...].astype(jnp.float32)
    c1 = jnp.float32(num_channels - 1)
    thr = jnp.float32(1.0 if num_channels == 1 else 1.0 / (num_channels - 1))
    # x > 0 / x < 0 branches; exactly-zero inputs stay 0 (matches torch code).
    v = jnp.where(x > 0, 1.0 - c1 * x,
                  jnp.where(x < 0, c1 * x + 1.0, 0.0))
    # Strict-inequality clamp outside the support, as in the reference.
    v = jnp.where((x < -thr) | (x > thr), 0.0, v)
    o_ref[...] = v.astype(o_ref.dtype)


def _sublane(dtype):
    # second-to-last-dim granularity per dtype width
    return {4: 8, 2: 16, 1: 32}[jnp.dtype(dtype).itemsize]


@functools.partial(jax.jit, static_argnames=("num_channels",))
def trilinear_layer_forward(x, num_channels=9):
    orig_shape = x.shape
    dtype = x.dtype
    n = x.size
    itemsize = jnp.dtype(dtype).itemsize
    sub = _sublane(dtype)

    # Lane-dense columns: multiple of 128; don't over-pad tiny inputs.
    cols = 512 if n >= 512 * sub else 128
    rows = max(1, _cdiv(n, cols))

    # Row tile so one block is <= ~2 MiB (double-buffered in+out stays well
    # inside every generation's default scoped VMEM, incl. v7x 64 MiB).
    target_rows = max(sub, ((2 * 1024 * 1024) // (cols * itemsize)) // sub * sub)
    if rows <= target_rows:
        row_tile = _cdiv(rows, sub) * sub          # full extent, sublane-aligned
    else:
        row_tile = target_rows
    padded_rows = _cdiv(rows, row_tile) * row_tile
    padded_n = padded_rows * cols

    x_flat = x.reshape(-1)
    if padded_n != n:
        # zero padding is safe: f(0) == 0 and the tail is sliced off below
        x_flat = jnp.pad(x_flat, (0, padded_n - n))
    x2d = x_flat.reshape(padded_rows, cols)

    kernel = functools.partial(_trilinear_kernel, num_channels=num_channels)
    out2d = pl.pallas_call(
        kernel,
        out_shape=jax.ShapeDtypeStruct((padded_rows, cols), dtype),
        grid=(padded_rows // row_tile,),
        in_specs=[pl.BlockSpec((row_tile, cols), lambda i: (i, 0))],
        out_specs=pl.BlockSpec((row_tile, cols), lambda i: (i, 0)),
        compiler_params=pltpu.CompilerParams(
            dimension_semantics=("parallel",)),
    )(x2d)

    out = out2d.reshape(-1)[:n].reshape(orig_shape)
    # torch: x[None, ..., None] -> elementwise -> .squeeze() == drop all size-1 dims
    return jnp.squeeze(out)


def trilinear_ref(x, num_channels=9):
    """Pure-JAX reference for correctness checking."""
    c1 = float(num_channels - 1)
    thr = 1.0 if num_channels == 1 else 1.0 / c1
    v = jnp.where(x > 0, 1.0 - c1 * x, jnp.where(x < 0, c1 * x + 1.0, 0.0))
    v = jnp.where(jnp.abs(x) > thr, 0.0, v)
    return jnp.squeeze(v)


if __name__ == "__main__":
    key = jax.random.PRNGKey(0)
    # Small NCHW-like activation tensor: batch=2, channels=4, spatial=16x16.
    x = jax.random.normal(key, (2, 4, 16, 16), dtype=jnp.float32)

    y = trilinear_layer_forward(x, num_channels=9)
    jax.block_until_ready(y)

    y_ref = trilinear_ref(x, 9)
    assert y.shape == y_ref.shape and y.dtype == x.dtype
    assert bool(jnp.allclose(y, y_ref, atol=1e-6, rtol=1e-6))
    print("KERNEL_OK")
</pallas_src>

<mosaic_0001>
module attributes {stable_mosaic.version = 11 : i64} {
  func.func @_trilinear_kernel(%arg0: i32, %arg1: memref<16x128xf32, #tpu.memory_space<vmem>>, %arg2: memref<16x128xf32, #tpu.memory_space<vmem>>) attributes {dimension_semantics = [#tpu.dimension_semantics<parallel>], iteration_bounds = array<i64: 1>, scalar_prefetch = 0 : i64, scratch_operands = 0 : i64, tpu.core_type = #tpu.core_type<tc>, window_params = [{transform_indices = @transform_0, window_bounds = array<i64: 16, 128>}, {transform_indices = @transform_1, window_bounds = array<i64: 16, 128>}]} {
    %c0 = arith.constant 0 : index
    %c0_0 = arith.constant 0 : index
    %0 = vector.load %arg1[%c0, %c0_0] : memref<16x128xf32, #tpu.memory_space<vmem>>, vector<16x128xf32>
    %cst = arith.constant 0.000000e+00 : f32
    %1 = vector.broadcast %cst : f32 to vector<16x128xf32>
    %2 = arith.cmpf ogt, %0, %1 : vector<16x128xf32>
    %cst_1 = arith.constant 8.000000e+00 : f32
    %3 = vector.broadcast %cst_1 : f32 to vector<16x128xf32>
    %4 = arith.mulf %3, %0 : vector<16x128xf32>
    %cst_2 = arith.constant 1.000000e+00 : f32
    %5 = vector.broadcast %cst_2 : f32 to vector<16x128xf32>
    %6 = arith.subf %5, %4 : vector<16x128xf32>
    %cst_3 = arith.constant 0.000000e+00 : f32
    %7 = vector.broadcast %cst_3 : f32 to vector<16x128xf32>
    %8 = arith.cmpf olt, %0, %7 : vector<16x128xf32>
    %cst_4 = arith.constant 8.000000e+00 : f32
    %9 = vector.broadcast %cst_4 : f32 to vector<16x128xf32>
    %10 = arith.mulf %9, %0 : vector<16x128xf32>
    %cst_5 = arith.constant 1.000000e+00 : f32
    %11 = vector.broadcast %cst_5 : f32 to vector<16x128xf32>
    %12 = arith.addf %10, %11 : vector<16x128xf32>
    %cst_6 = arith.constant 0.000000e+00 : f32
    %13 = vector.broadcast %cst_6 : f32 to vector<16x128xf32>
    %14 = arith.select %8, %12, %13 : vector<16x128xi1>, vector<16x128xf32>
    %15 = arith.select %2, %6, %14 : vector<16x128xi1>, vector<16x128xf32>
    %cst_7 = arith.constant 0.000000e+00 : f32
    %cst_8 = arith.constant 1.250000e-01 : f32
    %16 = arith.subf %cst_7, %cst_8 : f32
    %17 = vector.broadcast %16 : f32 to vector<16x128xf32>
    %18 = arith.cmpf olt, %0, %17 : vector<16x128xf32>
    %cst_9 = arith.constant 1.250000e-01 : f32
    %19 = vector.broadcast %cst_9 : f32 to vector<16x128xf32>
    %20 = arith.cmpf ogt, %0, %19 : vector<16x128xf32>
    %21 = arith.ori %18, %20 : vector<16x128xi1>
    %cst_10 = arith.constant 0.000000e+00 : f32
    %22 = vector.broadcast %cst_10 : f32 to vector<16x128xf32>
    %23 = arith.select %21, %22, %15 : vector<16x128xi1>, vector<16x128xf32>
    %c0_11 = arith.constant 0 : index
    %c0_12 = arith.constant 0 : index
    %24 = vector.load %arg2[%c0_11, %c0_12] : memref<16x128xf32, #tpu.memory_space<vmem>>, vector<16x128xf32>
    tpu.vector_store %arg2[%c0_11, %c0_12], %23 {strides = array<i32>} : memref<16x128xf32, #tpu.memory_space<vmem>>, vector<16x128xf32>,
    return
  }
  func.func @transform_0(%arg0: i32) -> (i32, i32) {
    %c0_i32 = arith.constant 0 : i32
    %c0_i32_0 = arith.constant 0 : i32
    return %arg0, %c0_i32 : i32, i32
  }
  func.func @transform_1(%arg0: i32) -> (i32, i32) {
    %c0_i32 = arith.constant 0 : i32
    %c0_i32_0 = arith.constant 0 : i32
    return %arg0, %c0_i32 : i32, i32
  }
}

</mosaic_0001>

<llo_original>
// kernel: trilinear_layer_forward.1
$region0: #{trilinear_layer_forward.1}
  #allocation0 [shape = 'u32[]', space=smem, size = 0x4, offset = 0x4, fixed_abs, tag = 'smem constant byte address 0x4 - core index']
  #allocation1 [shape = 'u32[144,128]{1,0:T(1,128)}', space=vmem, size = 0x12000, scoped, tag = 'internal scratch']
  %s0 = inlined_call_operand.vmem [shape: f32[16,128], index: 0, kind: input, shape index: {}]
  %s1 = inlined_call_operand.vmem [shape: f32[16,128], index: 1, kind: output, shape index: {}]
  %s2 = sld [smem:[#allocation0]]
  $region14: #{trilinear_layer_forward.1} parent=0
    _
  %s4 = ssub.s32 1, %s2
  %s5 = scalar_select 0, %s4, %s2
  // Predicated region
  $region2: #{trilinear_layer_forward.1} parent=0 // pred_check
    _
  $region3: #{trilinear_layer_forward.1} parent=0 // pred_check_branch
    %7 = sbr.rel (0) target = $region5
  $region4: #{trilinear_layer_forward.1} parent=0 // pred_region
    _
  $region5: #{trilinear_layer_forward.1} parent=0 // pred_fallthru
    _
  %v8 = vld [vmem:[%s0] sm:$0xff]
  %v9 = vld [vmem:[%s0 + $0x8] sm:$0xff]
  %vm10 = vcmp.gt.f32.partialorder %v8, 0.0
  %vm11 = vcmp.gt.f32.partialorder %v9, 0.0
  %v12 = vmul.f32 %v8, 8.0
  %v13 = vmul.f32 %v9, 8.0
  %v14 = vsub.f32 1.0, %v12
  %v15 = vsub.f32 1.0, %v13
  %vm16 = vcmp.lt.f32.partialorder %v8, 0.0
  %vm17 = vcmp.lt.f32.partialorder %v9, 0.0
  %v18 = vadd.f32 %v12, 1.0
  %v19 = vadd.f32 %v13, 1.0
  %v20 = vsel %vm16, %v18, 0.0
  %v21 = vsel %vm17, %v19, 0.0
  %v22 = vsel %vm10, %v14, %v20
  %v23 = vsel %vm11, %v15, %v21
  %vm24 = vcmp.lt.f32.partialorder %v8, -0.125
  %vm25 = vcmp.lt.f32.partialorder %v9, -0.125
  %vm26 = vcmp.gt.f32.partialorder %v8, 0.125
  %vm27 = vcmp.gt.f32.partialorder %v9, 0.125
  %vm28 = vmor %vm24, %vm26
  %vm29 = vmor %vm25, %vm27
  %v30 = vsel %vm28, 0.0, %v22
  %v31 = vsel %vm29, 0.0, %v23
  %32 = vst [vmem:[%s1] sm:$0xff] %v30
  %33 = vst [vmem:[%s1 + $0x8] sm:$0xff] %v31
  // Predicated region
  $region6: #{trilinear_layer_forward.1} parent=0 // pred_check
    _
  $region7: #{trilinear_layer_forward.1} parent=0 // pred_check_branch
    %35 = sbr.rel (0) target = $region9
  $region8: #{trilinear_layer_forward.1} parent=0 // pred_region
    _
  $region9: #{trilinear_layer_forward.1} parent=0 // pred_fallthru
    _
  // Predicated region
  $region10: #{trilinear_layer_forward.1} parent=0 // pred_check
    _
  $region11: #{trilinear_layer_forward.1} parent=0 // pred_check_branch
    %37 = sbr.rel (0) target = $region13
  $region12: #{trilinear_layer_forward.1} parent=0 // pred_region
    _
  $region13: #{trilinear_layer_forward.1} parent=0 // pred_fallthru
    _

</llo_original>
